<compile_context>
chip_gen: v7x
topology: tpu7x:2x2x1
jax: 0.10.0
libtpu: 0.0.40
codegen_flags: <defaults>
</compile_context>

<pallas_src>
import math

import jax
import jax.numpy as jnp
import numpy as np
from jax.experimental import pallas as pl
from jax.experimental.pallas import tpu as pltpu


def _gcn_kernel(x_ref, w_ref, a_ref, b_ref, o_ref, acc_ref):
    k = pl.program_id(1)

    @pl.when(k == 0)
    def _():
        acc_ref[...] = jnp.zeros_like(acc_ref)

    # h_k = X[k_tile] @ W : (TK, F) @ (F, C) -> (TK, C), f32 MXU accumulation.
    h_k = jnp.dot(x_ref[...], w_ref[...], preferred_element_type=jnp.float32)
    # acc += A[i_tile, k_tile] @ h_k : (TM, TK) @ (TK, C) -> (TM, C).
    acc_ref[...] += jnp.dot(
        a_ref[...], h_k.astype(a_ref.dtype), preferred_element_type=jnp.float32
    )

    @pl.when(k == pl.num_programs(1) - 1)
    def _():
        # Bias added exactly once (after full aggregation), then f32 log_softmax.
        agg = acc_ref[...] + b_ref[...]
        m = jnp.max(agg, axis=1, keepdims=True)
        shifted = agg - m
        lse = jnp.log(jnp.sum(jnp.exp(shifted), axis=1, keepdims=True))
        o_ref[...] = (shifted - lse).astype(o_ref.dtype)


def gcn_one_layer(x, edge_index, edge_weight, weight, bias, *, tm=128, tk=256):
    """x: [N, F] f32, edge_index: [2, E] int32 (row 0 = src, row 1 = dst),
    edge_weight: [E] f32, weight: [F, C], bias: [C].  Returns [N, C] log-probs."""
    N, F = x.shape
    C = weight.shape[1]

    # --- glue: densify the sparse graph. out[dst] += w * h[src]  <=>  A[dst, src] = w ---
    # TODO(synk): for large/realistic graphs replace the dense N x N adjacency with an
    # edge-list/CSR aggregation via PrefetchScalarGridSpec (or block-sparse tile skipping).
    src = edge_index[0]
    dst = edge_index[1]
    adj = jnp.zeros((N, N), dtype=jnp.float32).at[dst, src].add(edge_weight)

    # Pad N up to a common multiple of (tm, tk); padded rows/cols are zero and sliced off.
    blk = math.lcm(tm, tk)
    Np = ((N + blk - 1) // blk) * blk
    if Np != N:
        adj = jnp.pad(adj, ((0, Np - N), (0, Np - N)))
        x = jnp.pad(x, ((0, Np - N), (0, 0)))

    # HBM-bandwidth-bound on streaming A -> bf16 for the big operands, f32 accumulation.
    adj_bf16 = adj.astype(jnp.bfloat16)
    x_bf16 = x.astype(jnp.bfloat16)
    w_bf16 = weight.astype(jnp.bfloat16)
    bias2d = bias.reshape(1, C).astype(jnp.float32)

    grid = (Np // tm, Np // tk)

    out = pl.pallas_call(
        _gcn_kernel,
        out_shape=jax.ShapeDtypeStruct((Np, C), jnp.float32),
        grid_spec=pltpu.PrefetchScalarGridSpec(
            num_scalar_prefetch=0,
            grid=grid,
            in_specs=[
                pl.BlockSpec((tk, F), lambda i, k: (k, 0)),   # X rows for this K tile
                pl.BlockSpec((F, C), lambda i, k: (0, 0)),    # W resident
                pl.BlockSpec((tm, tk), lambda i, k: (i, k)),  # A tile (streamed, bf16)
                pl.BlockSpec((1, C), lambda i, k: (0, 0)),    # bias resident
            ],
            out_specs=pl.BlockSpec((tm, C), lambda i, k: (i, 0)),
            scratch_shapes=[pltpu.VMEM((tm, C), jnp.float32)],
        ),
        compiler_params=pltpu.CompilerParams(
            dimension_semantics=("parallel", "arbitrary"),
            vmem_limit_bytes=48 << 20,  # safe on v7x (64 MiB physical) and below
        ),
    )(x_bf16, w_bf16, adj_bf16, bias2d)
    return out[:N]


if __name__ == "__main__":
    # Small-but-tiled shapes: N nodes, F input features, C classes, E directed edges.
    N, F, C, E = 512, 32, 8, 2048

    key = jax.random.PRNGKey(0)
    kx, kw, kb, ks, kd, ke = jax.random.split(key, 6)

    x = jax.random.normal(kx, (N, F), dtype=jnp.float32)

    # Glorot weight [F, C]; small nonzero bias to exercise the epilogue bias path.
    limit = (6.0 / (F + C)) ** 0.5
    weight = jax.random.uniform(kw, (F, C), minval=-limit, maxval=limit, dtype=jnp.float32)
    bias = 0.1 * jax.random.normal(kb, (C,), dtype=jnp.float32)

    # Random graph: edge_index [2, E] (src, dst) and positive edge weights (the
    # precomputed `norm` / data.edge_attr of the original module).
    src = jax.random.randint(ks, (E,), 0, N, dtype=jnp.int32)
    dst = jax.random.randint(kd, (E,), 0, N, dtype=jnp.int32)
    edge_index = jnp.stack([src, dst], axis=0)
    edge_weight = jax.random.uniform(ke, (E,), minval=0.1, maxval=1.0, dtype=jnp.float32)

    # Dropout is identity in eval mode (training=False), so it is a no-op here.
    out = gcn_one_layer(x, edge_index, edge_weight, weight, bias)
    jax.block_until_ready(out)
    assert out.shape == (N, C)

    # Plain-JAX f32 reference; loose tolerance accounts for the bf16-streamed operands.
    adj_ref = jnp.zeros((N, N), dtype=jnp.float32).at[dst, src].add(edge_weight)
    ref = jax.nn.log_softmax(adj_ref @ (x @ weight) + bias, axis=1)
    np.testing.assert_allclose(np.asarray(out), np.asarray(ref), atol=1e-1)

    print("KERNEL_OK")
</pallas_src>

<mosaic_0001>
module attributes {stable_mosaic.version = 11 : i64} {
  func.func @_gcn_kernel(%arg0: i32, %arg1: i32, %arg2: memref<256x32xbf16, #tpu.memory_space<vmem>>, %arg3: memref<32x8xbf16, #tpu.memory_space<vmem>>, %arg4: memref<128x256xbf16, #tpu.memory_space<vmem>>, %arg5: memref<1x8xf32, #tpu.memory_space<vmem>>, %arg6: memref<128x8xf32, #tpu.memory_space<vmem>>, %arg7: memref<128x8xf32, #tpu.memory_space<vmem>>) attributes {dimension_semantics = [#tpu.dimension_semantics<parallel>, #tpu.dimension_semantics<arbitrary>], iteration_bounds = array<i64: 4, 2>, scalar_prefetch = 0 : i64, scratch_operands = 1 : i64, tpu.core_type = #tpu.core_type<tc>, window_params = [{transform_indices = @transform_0, window_bounds = array<i64: 256, 32>}, {pipeline_mode = #tpu.pipeline_mode<synchronous>, transform_indices = @transform_1, window_bounds = array<i64: 32, 8>}, {transform_indices = @transform_2, window_bounds = array<i64: 128, 256>}, {pipeline_mode = #tpu.pipeline_mode<synchronous>, transform_indices = @transform_3, window_bounds = array<i64: 1, 8>}, {transform_indices = @transform_4, window_bounds = array<i64: 128, 8>}]} {
    %c0_i32 = arith.constant 0 : i32
    %0 = arith.cmpi eq, %arg1, %c0_i32 : i32
    %1 = arith.extui %0 : i1 to i32
    %c0_i32_0 = arith.constant 0 : i32
    %2 = arith.cmpi ne, %1, %c0_i32_0 : i32
    scf.if %2 {
      %cst_12 = arith.constant 0.000000e+00 : f32
      %15 = vector.broadcast %cst_12 : f32 to vector<128x8xf32>
      %c0_13 = arith.constant 0 : index
      %c0_14 = arith.constant 0 : index
      %16 = vector.load %arg7[%c0_13, %c0_14] : memref<128x8xf32, #tpu.memory_space<vmem>>, vector<128x8xf32>
      tpu.vector_store %arg7[%c0_13, %c0_14], %15 {strides = array<i32>} : memref<128x8xf32, #tpu.memory_space<vmem>>, vector<128x8xf32>,
    } else {
    }
    %c0 = arith.constant 0 : index
    %c0_1 = arith.constant 0 : index
    %3 = vector.load %arg2[%c0, %c0_1] : memref<256x32xbf16, #tpu.memory_space<vmem>>, vector<256x32xbf16>
    %c0_2 = arith.constant 0 : index
    %c0_3 = arith.constant 0 : index
    %4 = vector.load %arg3[%c0_2, %c0_3] : memref<32x8xbf16, #tpu.memory_space<vmem>>, vector<32x8xbf16>
    %cst = arith.constant dense<0.000000e+00> : vector<256x8xf32>
    %5 = tpu.matmul %3, %4, %cst {dimension_numbers = #tpu.dot_dimension_numbers<[1], [0], [0], [1], [0, 0, 1, 1], [], []>} : vector<256x32xbf16>, vector<32x8xbf16>, vector<256x8xf32> -> vector<256x8xf32>
    %c0_4 = arith.constant 0 : index
    %c0_5 = arith.constant 0 : index
    %6 = vector.load %arg7[%c0_4, %c0_5] : memref<128x8xf32, #tpu.memory_space<vmem>>, vector<128x8xf32>
    %c0_6 = arith.constant 0 : index
    %c0_7 = arith.constant 0 : index
    %7 = vector.load %arg4[%c0_6, %c0_7] : memref<128x256xbf16, #tpu.memory_space<vmem>>, vector<128x256xbf16>
    %8 = arith.truncf %5 : vector<256x8xf32> to vector<256x8xbf16>
    %cst_8 = arith.constant dense<0.000000e+00> : vector<128x8xf32>
    %9 = tpu.matmul %7, %8, %cst_8 {dimension_numbers = #tpu.dot_dimension_numbers<[1], [0], [0], [1], [0, 0, 1, 1], [], []>} : vector<128x256xbf16>, vector<256x8xbf16>, vector<128x8xf32> -> vector<128x8xf32>
    %10 = arith.addf %6, %9 : vector<128x8xf32>
    %c0_9 = arith.constant 0 : index
    %c0_10 = arith.constant 0 : index
    %11 = vector.load %arg7[%c0_9, %c0_10] : memref<128x8xf32, #tpu.memory_space<vmem>>, vector<128x8xf32>
    tpu.vector_store %arg7[%c0_9, %c0_10], %10 {strides = array<i32>} : memref<128x8xf32, #tpu.memory_space<vmem>>, vector<128x8xf32>,
    %c1_i32 = arith.constant 1 : i32
    %12 = arith.cmpi eq, %arg1, %c1_i32 : i32
    %13 = arith.extui %12 : i1 to i32
    %c0_i32_11 = arith.constant 0 : i32
    %14 = arith.cmpi ne, %13, %c0_i32_11 : i32
    scf.if %14 {
      %c0_12 = arith.constant 0 : index
      %c0_13 = arith.constant 0 : index
      %15 = vector.load %arg7[%c0_12, %c0_13] : memref<128x8xf32, #tpu.memory_space<vmem>>, vector<128x8xf32>
      %c0_14 = arith.constant 0 : index
      %c0_15 = arith.constant 0 : index
      %16 = vector.load %arg5[%c0_14, %c0_15] : memref<1x8xf32, #tpu.memory_space<vmem>>, vector<1x8xf32>
      %17 = vector.broadcast %16 : vector<1x8xf32> to vector<128x8xf32>
      %18 = arith.addf %15, %17 : vector<128x8xf32>
      %cst_16 = arith.constant dense<0xFF800000> : vector<128xf32>
      %19 = vector.multi_reduction <maximumf>, %18, %cst_16 [1] : vector<128x8xf32> to vector<128xf32>
      %20 = vector.shape_cast %19 : vector<128xf32> to vector<128x1xf32>
      %21 = vector.broadcast %20 : vector<128x1xf32> to vector<128x8xf32>
      %22 = arith.subf %18, %21 : vector<128x8xf32>
      %23 = math.exp %22 : vector<128x8xf32>
      %cst_17 = arith.constant dense<0.000000e+00> : vector<128xf32>
      %24 = vector.multi_reduction <add>, %23, %cst_17 [1] : vector<128x8xf32> to vector<128xf32>
      %25 = vector.shape_cast %24 : vector<128xf32> to vector<128x1xf32>
      %26 = math.log %25 : vector<128x1xf32>
      %27 = vector.broadcast %26 : vector<128x1xf32> to vector<128x8xf32>
      %28 = arith.subf %22, %27 : vector<128x8xf32>
      %c0_18 = arith.constant 0 : index
      %c0_19 = arith.constant 0 : index
      %29 = vector.load %arg6[%c0_18, %c0_19] : memref<128x8xf32, #tpu.memory_space<vmem>>, vector<128x8xf32>
      tpu.vector_store %arg6[%c0_18, %c0_19], %28 {strides = array<i32>} : memref<128x8xf32, #tpu.memory_space<vmem>>, vector<128x8xf32>,
    } else {
    }
    return
  }
  func.func @transform_0(%arg0: i32, %arg1: i32) -> (i32, i32) {
    %c0_i32 = arith.constant 0 : i32
    %c0_i32_0 = arith.constant 0 : i32
    return %arg1, %c0_i32 : i32, i32
  }
  func.func @transform_1(%arg0: i32, %arg1: i32) -> (i32, i32) {
    %c0_i32 = arith.constant 0 : i32
    %c0_i32_0 = arith.constant 0 : i32
    %c0_i32_1 = arith.constant 0 : i32
    return %c0_i32, %c0_i32_0 : i32, i32
  }
  func.func @transform_2(%arg0: i32, %arg1: i32) -> (i32, i32) {
    %c0_i32 = arith.constant 0 : i32
    return %arg0, %arg1 : i32, i32
  }
  func.func @transform_3(%arg0: i32, %arg1: i32) -> (i32, i32) {
    %c0_i32 = arith.constant 0 : i32
    %c0_i32_0 = arith.constant 0 : i32
    %c0_i32_1 = arith.constant 0 : i32
    return %c0_i32, %c0_i32_0 : i32, i32
  }
  func.func @transform_4(%arg0: i32, %arg1: i32) -> (i32, i32) {
    %c0_i32 = arith.constant 0 : i32
    %c0_i32_0 = arith.constant 0 : i32
    return %arg0, %c0_i32 : i32, i32
  }
}

</mosaic_0001>

<llo_original>
// kernel: tpu_custom_call.1
$region0: #{tpu_custom_call.1}
  #allocation0 [shape = 'u32[]', space=smem, size = 0x4, offset = 0x4, fixed_abs, tag = 'smem constant byte address 0x4 - core index']
  #allocation1 [shape = 'u32[144,128]{1,0:T(1,128)}', space=vmem, size = 0x12000, scoped, tag = 'internal scratch']
  #allocation2 [shape = 'f32[128,8]{1,0:T(8,128)}', space=vmem, size = 0x10000, scoped, tag = 'scratch operand']
  %s0 = inlined_call_operand.vmem [shape: bf16[512,32], index: 0, kind: input, shape index: {}]
  %s1 = inlined_call_operand.vmem [shape: bf16[32,8], index: 1, kind: input, shape index: {}]
  %s2 = inlined_call_operand.hbm [shape: bf16[512,512], index: 2, kind: input, shape index: {}]
  %s3 = inlined_call_operand.vmem [shape: f32[1,8], index: 3, kind: input, shape index: {}]
  %s4 = inlined_call_operand.vmem [shape: f32[512,8], index: 4, kind: output, shape index: {}]
  %s5 = sld [smem:[#allocation0]]
  $region61: #{tpu_custom_call.1} parent=0
    _
  %s7 = ssub.s32 1, %s5
  %s8 = scalar_select 0, %s7, %s5
  $region1: #{tpu_custom_call.1} parent=0
    #allocation3 [shape = 'u8[131072]{0}', space=vmem, size = 0x20000, scoped, tag = 'input window, operand 2']
    #allocation4 [shape = 's32[2]{0}', space=sflag, size = 0x8, scoped, tag = 'scoped memory for tpu_custom_call.1']
    %9 = vsyncpa [#allocation4], 0
    %s10 = scalar_lea.sflag [#allocation4], 1
    %11 = vsyncpa %s10, 0
    loop: start=0, step=1, limit=10
    $region2: #{tpu_custom_call.1} parent=1 // loop_pre_header
      _
    $region3: #{tpu_custom_call.1} parent=1 // loop_header
      %s13 = sphi 0, %s17
      %p14 = scmp.ge.s32.totalorder %s13, 10
      %s20 = sphi 0, %s32
      %s21 = sphi 0, %s28
      %s22 = sphi 0, %s20
      %s23 = sphi 0, %s21
      %s24 = sphi 0, %s22
      %s25 = sphi 0, %s23
      %s35 = sphi 0, %s37
      %s38 = sphi 0, %s35
      %s39 = sphi 0, %s38
      %s55 = sphi 0, %s39
      %s59 = sphi 0, %s59
      %s61 = sphi 0, %s59
      %s62 = sphi 0, %s61
      %s76 = sphi 0, %s62
      %s84 = sphi 0, %s86
      %s87 = sphi 0, %s84
      %s88 = sphi 0, %s87
      %s104 = sphi 0, %s88
      %s108 = sphi 0, %s108
      %s110 = sphi 0, %s108
      %s111 = sphi 0, %s110
      %s125 = sphi 0, %s111
      %s131 = sphi 0, %s133
      %s134 = sphi 0, %s131
      %s135 = sphi 0, %s134
      %s151 = sphi 0, %s135
    $region4: #{tpu_custom_call.1} parent=1 // loop_header_branch
      %16 = sbr.rel (%p14) target = $region8
    $region5: #{tpu_custom_call.1} parent=1 // loop_body
      %s18 = ssub.s32 %s13, 1
      %s19 = ssub.s32 %s13, 2
      %s26 = sadd.s32 1, %s21
      %p27 = scmp.ge.s32.totalorder %s26, 2
      %s28 = scalar_select %p27, 0, %s26
      %s29 = sadd.s32 1, %s20
      %s30 = scalar_select %p27, %s29, %s20
      %p31 = scmp.ge.s32.totalorder %s30, 4
      %s32 = scalar_select %p31, 0, %s30
      %s33 = ssub.s32 %s21, %s28
      %p34 = scmp.eq.s32.totalorder %s33, 0
      %s36 = sadd.s32 %s35, 1
      %s37 = scalar_select %p34, %s35, %s36
      %p40 = pneg %p34
      %p41 = scmp.eq.s32.totalorder %s13, 7
      %p42 = por %p40, %p41
      %p43 = scmp.ne.s32.totalorder %s35, %s38
      %p44 = scmp.eq.s32.totalorder %s13, 0
      %p45 = por %p43, %p44
      %p46 = scmp.ne.s32.totalorder %s35, %s38
      %p47 = scmp.eq.s32.totalorder %s18, 7
      %p48 = por %p46, %p47
      %p49 = scmp.ne.s32.totalorder %s38, %s39
      %p50 = scmp.eq.s32.totalorder %s18, 0
      %p51 = por %p49, %p50
      %p52 = scmp.ne.s32.totalorder %s38, %s39
      %p53 = scmp.eq.s32.totalorder %s19, 7
      %p54 = por %p52, %p53
      %p56 = scmp.ne.s32.totalorder %s39, %s55
      %p57 = scmp.eq.s32.totalorder %s19, 0
      %p58 = por %p56, %p57
      %s60 = sadd.s32 %s59, 1
      %p63 = scmp.eq.s32.totalorder %s13, 7
      %p64 = scmp.ne.s32.totalorder %s59, %s61
      %p65 = scmp.eq.s32.totalorder %s13, 0
      %p66 = por %p64, %p65
      %p67 = scmp.ne.s32.totalorder %s59, %s61
      %p68 = scmp.eq.s32.totalorder %s18, 7
      %p69 = por %p67, %p68
      %p70 = scmp.ne.s32.totalorder %s61, %s62
      %p71 = scmp.eq.s32.totalorder %s18, 0
      %p72 = por %p70, %p71
      %p73 = scmp.ne.s32.totalorder %s61, %s62
      %p74 = scmp.eq.s32.totalorder %s19, 7
      %p75 = por %p73, %p74
      %p77 = scmp.ne.s32.totalorder %s62, %s76
      %p78 = scmp.eq.s32.totalorder %s19, 0
      %p79 = por %p77, %p78
      %s80 = ssub.s32 %s20, %s32
      %s81 = ssub.s32 %s21, %s28
      %s82 = sor.u32 %s80, %s81
      %p83 = scmp.eq.s32.totalorder %s82, 0
      %s85 = sadd.s32 %s84, 1
      %s86 = scalar_select %p83, %s84, %s85
      %p89 = pneg %p83
      %p90 = scmp.eq.s32.totalorder %s13, 7
      %p91 = por %p89, %p90
      %p92 = scmp.ne.s32.totalorder %s84, %s87
      %p93 = scmp.eq.s32.totalorder %s13, 0
      %p94 = por %p92, %p93
      %p95 = scmp.ne.s32.totalorder %s84, %s87
      %p96 = scmp.eq.s32.totalorder %s18, 7
      %p97 = por %p95, %p96
      %p98 = scmp.ne.s32.totalorder %s87, %s88
      %p99 = scmp.eq.s32.totalorder %s18, 0
      %p100 = por %p98, %p99
      %p101 = scmp.ne.s32.totalorder %s87, %s88
      %p102 = scmp.eq.s32.totalorder %s19, 7
      %p103 = por %p101, %p102
      %p105 = scmp.ne.s32.totalorder %s88, %s104
      %p106 = scmp.eq.s32.totalorder %s19, 0
      %p107 = por %p105, %p106
      %s109 = sadd.s32 %s108, 1
      %p112 = scmp.eq.s32.totalorder %s13, 7
      %p113 = scmp.ne.s32.totalorder %s108, %s110
      %p114 = scmp.eq.s32.totalorder %s13, 0
      %p115 = por %p113, %p114
      %p116 = scmp.ne.s32.totalorder %s108, %s110
      %p117 = scmp.eq.s32.totalorder %s18, 7
      %p118 = por %p116, %p117
      %p119 = scmp.ne.s32.totalorder %s110, %s111
      %p120 = scmp.eq.s32.totalorder %s18, 0
      %p121 = por %p119, %p120
      %p122 = scmp.ne.s32.totalorder %s110, %s111
      %p123 = scmp.eq.s32.totalorder %s19, 7
      %p124 = por %p122, %p123
      %p126 = scmp.ne.s32.totalorder %s111, %s125
      %p127 = scmp.eq.s32.totalorder %s19, 0
      %p128 = por %p126, %p127
      %s129 = ssub.s32 %s20, %s32
      %p130 = scmp.eq.s32.totalorder %s129, 0
      %s132 = sadd.s32 %s131, 1
      %s133 = scalar_select %p130, %s131, %s132
      %p136 = pneg %p130
      %p137 = scmp.eq.s32.totalorder %s13, 7
      %p138 = por %p136, %p137
      %p139 = scmp.ne.s32.totalorder %s131, %s134
      %p140 = scmp.eq.s32.totalorder %s13, 0
      %p141 = por %p139, %p140
      %p142 = scmp.ne.s32.totalorder %s131, %s134
      %p143 = scmp.eq.s32.totalorder %s18, 7
      %p144 = por %p142, %p143
      %p145 = scmp.ne.s32.totalorder %s134, %s135
      %p146 = scmp.eq.s32.totalorder %s18, 0
      %p147 = por %p145, %p146
      %p148 = scmp.ne.s32.totalorder %s134, %s135
      %p149 = scmp.eq.s32.totalorder %s19, 7
      %p150 = por %p148, %p149
      %p152 = scmp.ne.s32.totalorder %s135, %s151
      %p153 = scmp.eq.s32.totalorder %s19, 0
      %p154 = por %p152, %p153
      %p155 = scmp.le.s32.totalorder 1, %s13
      %p156 = scmp.lt.s32.totalorder %s13, 9
      %p157 = pnand %p155, %p156
      %p158 = pneg %p157
      // Predicated region
      $region9: #{tpu_custom_call.1} parent=5 // pred_check
        _
      $region10: #{tpu_custom_call.1} parent=5 // pred_check_branch
        %160 = sbr.rel (%p157) target = $region12
      $region11: #{tpu_custom_call.1} parent=5 // pred_region
        %s161 = ssub.s32 %s13, 1
        // Predicated region
        $region13: #{tpu_custom_call.1} parent=11 // pred_check
          %p162 = pneg %p72
        $region14: #{tpu_custom_call.1} parent=11 // pred_check_branch
          %164 = sbr.rel (%p162) target = $region16
        $region15: #{tpu_custom_call.1} parent=11 // pred_region
          _
        $region16: #{tpu_custom_call.1} parent=11 // pred_fallthru
          _
        // Predicated region
        $region17: #{tpu_custom_call.1} parent=11 // pred_check
          %p165 = pneg %p121
        $region18: #{tpu_custom_call.1} parent=11 // pred_check_branch
          %167 = sbr.rel (%p165) target = $region20
        $region19: #{tpu_custom_call.1} parent=11 // pred_region
          _
        $region20: #{tpu_custom_call.1} parent=11 // pred_fallthru
          _
      $region12: #{tpu_custom_call.1} parent=5 // pred_fallthru
        _
      %p168 = scmp.lt.s32.totalorder %s13, 8
      // Predicated region
      $region21: #{tpu_custom_call.1} parent=5 // pred_check
        %p169 = pneg %p168
      $region22: #{tpu_custom_call.1} parent=5 // pred_check_branch
        %171 = sbr.rel (%p169) target = $region24
      $region23: #{tpu_custom_call.1} parent=5 // pred_region
        // Predicated region
        $region25: #{tpu_custom_call.1} parent=23 // pred_check
          %p172 = pneg %p45
        $region26: #{tpu_custom_call.1} parent=23 // pred_check_branch
          %174 = sbr.rel (%p172) target = $region28
        $region27: #{tpu_custom_call.1} parent=23 // pred_region
          %s175 = smul.u32 32, %s21
          %p176 = scmp.lt.s32.totalorder %s175, 63
          %s177 = scalar_select %p176, %s175, 63
          %s178 = smul.addr %s177, 4
          %s179 = scalar_lea.vmem %s0, %s178
          %s180 = smul.u32 32, %s21
        $region28: #{tpu_custom_call.1} parent=23 // pred_fallthru
          _
        // Predicated region
        $region29: #{tpu_custom_call.1} parent=23 // pred_check
          %p181 = pneg %p94
        $region30: #{tpu_custom_call.1} parent=23 // pred_check_branch
          %183 = sbr.rel (%p181) target = $region32
        $region31: #{tpu_custom_call.1} parent=23 // pred_region
          %s184 = sand.u32 %s84, 1
          %s185 = scalar_lea.sflag [#allocation4], %s184
          %s186 = sand.u32 %s84, 1
          %s187 = smul.addr %s186, 128
          %s188 = scalar_lea.vmem [#allocation3], %s187
          %s189 = smul.u32 16, %s20
          %s190 = smul.u32 2, %s21
          %s192 = ssub.s32 2048, 2048
          %193 = vsyncadd %s185, %s192
          %s194 = smul.addr %s189, 4
          %s195 = sadd.s32 %s190, %s194
          %s196 = smul.addr %s195, 64
          %s197 = scalar_lea.hbm %s2, %s196
          %s198 = sshll.u32 %s188, 4
          %s199 = int_to_ptr.vmem [resolvable:$true] %s198
          %204 = dma.hbm_to_vmem [thread:$0]  %s197, 2048, %s199, %s185, 256, 128, 8
        $region32: #{tpu_custom_call.1} parent=23 // pred_fallthru
          _
      $region24: #{tpu_custom_call.1} parent=5 // pred_fallthru
        _
      %p205 = scmp.le.s32.totalorder 1, %s13
      %p206 = scmp.lt.s32.totalorder %s13, 9
      %p207 = pnand %p205, %p206
      %p208 = pneg %p207
      // Predicated region
      $region33: #{tpu_custom_call.1} parent=5 // pred_check
        _
      $region34: #{tpu_custom_call.1} parent=5 // pred_check_branch
        %210 = sbr.rel (%p207) target = $region36
      $region35: #{tpu_custom_call.1} parent=5 // pred_region
        %s211 = ssub.s32 %s13, 1
        %s212 = sand.u32 %s87, 1
        %s213 = scalar_lea.sflag [#allocation4], %s212
        %s214 = sand.u32 %s87, 1
        %s215 = smul.addr %s214, 128
        %s216 = scalar_lea.vmem [#allocation3], %s215
        // Predicated region
        $region37: #{tpu_custom_call.1} parent=35 // pred_check
          %p217 = pneg %p100
        $region38: #{tpu_custom_call.1} parent=35 // pred_check_branch
          %219 = sbr.rel (%p217) target = $region40
        $region39: #{tpu_custom_call.1} parent=35 // pred_region
          %220 = dma.done %s213, 2048
        $region40: #{tpu_custom_call.1} parent=35 // pred_fallthru
          _
        %s221 = smul.u32 32, %s23
        %p222 = scmp.lt.s32.totalorder %s221, 63
        %s223 = scalar_select %p222, %s221, 63
        %s224 = smul.addr %s223, 4
        %s225 = scalar_lea.vmem %s0, %s224
        %p226 = pneg %p51
        %p227 = pneg %p48
        %p228 = pneg %p72
        %p229 = pneg %p69
        %s230 = sand.u32 %s87, 1
        %s231 = scalar_lea.sflag [#allocation4], %s230
        %s232 = sand.u32 %s87, 1
        %s233 = smul.addr %s232, 128
        %s234 = scalar_lea.vmem [#allocation3], %s233
        %p235 = pneg %p100
        %p236 = pneg %p97
        %p237 = pneg %p121
        %p238 = pneg %p118
        %p239 = pneg %p147
        %p240 = pneg %p144
        %s241 = smul.u32 16, %s22
        %p242 = scmp.lt.s32.totalorder %s241, 63
        %s243 = scalar_select %p242, %s241, 63
        %s244 = smul.addr %s243, 8
        %s245 = scalar_lea.vmem %s4, %s244
        %s246 = smul.u32 32, %s23
        %p247 = scmp.lt.s32.totalorder %s246, 63
        %s248 = scalar_select %p247, %s246, 63
        %s249 = smul.addr %s248, 4
        %s250 = scalar_lea.vmem %s0, %s249
        %s251 = smul.u32 32, %s23
        %s252 = smul.u32 16, %s22
        %s253 = smul.u32 2, %s23
        %s254 = smul.u32 16, %s22
        %p255 = scmp.lt.s32.totalorder %s254, 63
        %s256 = scalar_select %p255, %s254, 63
        %s257 = smul.addr %s256, 8
        %s258 = scalar_lea.vmem %s4, %s257
        %s259 = smul.u32 16, %s22
        %p261 = scmp.eq.s32.totalorder %s23, 0
        // Predicated region
        $region41: #{tpu_custom_call.1} parent=35 // pred_check
          %p262 = pneg %p261
        $region42: #{tpu_custom_call.1} parent=35 // pred_check_branch
          %264 = sbr.rel (%p262) target = $region44
        $region43: #{tpu_custom_call.1} parent=35 // pred_region
          %vm265 = vcmask 64512
          %266 = vst.msk [vmem:[#allocation2] sm:$0xff] %vm265, 0.0
          %267 = vst.msk [vmem:[#allocation2 + $0x8] sm:$0xff] %vm265, 0.0
          %268 = vst.msk [vmem:[#allocation2 + $0x10] sm:$0xff] %vm265, 0.0
          %269 = vst.msk [vmem:[#allocation2 + $0x18] sm:$0xff] %vm265, 0.0
          %270 = vst.msk [vmem:[#allocation2 + $0x20] sm:$0xff] %vm265, 0.0
          %271 = vst.msk [vmem:[#allocation2 + $0x28] sm:$0xff] %vm265, 0.0
          %272 = vst.msk [vmem:[#allocation2 + $0x30] sm:$0xff] %vm265, 0.0
          %273 = vst.msk [vmem:[#allocation2 + $0x38] sm:$0xff] %vm265, 0.0
          %274 = vst.msk [vmem:[#allocation2 + $0x40] sm:$0xff] %vm265, 0.0
          %275 = vst.msk [vmem:[#allocation2 + $0x48] sm:$0xff] %vm265, 0.0
          %276 = vst.msk [vmem:[#allocation2 + $0x50] sm:$0xff] %vm265, 0.0
          %277 = vst.msk [vmem:[#allocation2 + $0x58] sm:$0xff] %vm265, 0.0
          %278 = vst.msk [vmem:[#allocation2 + $0x60] sm:$0xff] %vm265, 0.0
          %279 = vst.msk [vmem:[#allocation2 + $0x68] sm:$0xff] %vm265, 0.0
          %280 = vst.msk [vmem:[#allocation2 + $0x70] sm:$0xff] %vm265, 0.0
          %281 = vst.msk [vmem:[#allocation2 + $0x78] sm:$0xff] %vm265, 0.0
        $region44: #{tpu_custom_call.1} parent=35 // pred_fallthru
          _
        %v282 = vld [vmem:[%s250] sm:$0xf]
        %v283 = vld [vmem:[%s250 + $0x4] sm:$0xf]
        %v284 = vld [vmem:[%s250 + $0x8] sm:$0xf]
        %v285 = vld [vmem:[%s250 + $0xc] sm:$0xf]
        %v286 = vld [vmem:[%s250 + $0x10] sm:$0xf]
        %v287 = vld [vmem:[%s250 + $0x14] sm:$0xf]
        %v288 = vld [vmem:[%s250 + $0x18] sm:$0xf]
        %v289 = vld [vmem:[%s250 + $0x1c] sm:$0xf]
        %v290 = vld [vmem:[%s250 + $0x20] sm:$0xf]
        %v291 = vld [vmem:[%s250 + $0x24] sm:$0xf]
        %v292 = vld [vmem:[%s250 + $0x28] sm:$0xf]
        %v293 = vld [vmem:[%s250 + $0x2c] sm:$0xf]
        %v294 = vld [vmem:[%s250 + $0x30] sm:$0xf]
        %v295 = vld [vmem:[%s250 + $0x34] sm:$0xf]
        %v296 = vld [vmem:[%s250 + $0x38] sm:$0xf]
        %v297 = vld [vmem:[%s250 + $0x3c] sm:$0xf]
        %v298 = vld [vmem:[%s250 + $0x40] sm:$0xf]
        %v299 = vld [vmem:[%s250 + $0x44] sm:$0xf]
        %v300 = vld [vmem:[%s250 + $0x48] sm:$0xf]
        %v301 = vld [vmem:[%s250 + $0x4c] sm:$0xf]
        %v302 = vld [vmem:[%s250 + $0x50] sm:$0xf]
        %v303 = vld [vmem:[%s250 + $0x54] sm:$0xf]
        %v304 = vld [vmem:[%s250 + $0x58] sm:$0xf]
        %v305 = vld [vmem:[%s250 + $0x5c] sm:$0xf]
        %v306 = vld [vmem:[%s250 + $0x60] sm:$0xf]
        %v307 = vld [vmem:[%s250 + $0x64] sm:$0xf]
        %v308 = vld [vmem:[%s250 + $0x68] sm:$0xf]
        %v309 = vld [vmem:[%s250 + $0x6c] sm:$0xf]
        %v310 = vld [vmem:[%s250 + $0x70] sm:$0xf]
        %v311 = vld [vmem:[%s250 + $0x74] sm:$0xf]
        %v312 = vld [vmem:[%s250 + $0x78] sm:$0xf]
        %v313 = vld [vmem:[%s250 + $0x7c] sm:$0xf]
        %v314 = vld [vmem:[%s1] sm:$0xf]
        %v315 = vld [vmem:[%s1 + $0x4] sm:$0xf]
        %v316 = vld [vmem:[%s1 + $0x8] sm:$0xf]
        %v317 = vld [vmem:[%s1 + $0xc] sm:$0xf]
        %v350 = vunpack.c.l.b16 %v282
        %v351 = vunpack.c.l.b16 %v283
        %v352 = vunpack.c.l.b16 %v284
        %v353 = vunpack.c.l.b16 %v285
        %v354 = vunpack.c.l.b16 %v286
        %v355 = vunpack.c.l.b16 %v287
        %v356 = vunpack.c.l.b16 %v288
        %v357 = vunpack.c.l.b16 %v289
        %v358 = vunpack.c.l.b16 %v290
        %v359 = vunpack.c.l.b16 %v291
        %v360 = vunpack.c.l.b16 %v292
        %v361 = vunpack.c.l.b16 %v293
        %v362 = vunpack.c.l.b16 %v294
        %v363 = vunpack.c.l.b16 %v295
        %v364 = vunpack.c.l.b16 %v296
        %v365 = vunpack.c.l.b16 %v297
        %v366 = vunpack.c.l.b16 %v298
        %v367 = vunpack.c.l.b16 %v299
        %v368 = vunpack.c.l.b16 %v300
        %v369 = vunpack.c.l.b16 %v301
        %v370 = vunpack.c.l.b16 %v302
        %v371 = vunpack.c.l.b16 %v303
        %v372 = vunpack.c.l.b16 %v304
        %v373 = vunpack.c.l.b16 %v305
        %v374 = vunpack.c.l.b16 %v306
        %v375 = vunpack.c.l.b16 %v307
        %v376 = vunpack.c.l.b16 %v308
        %v377 = vunpack.c.l.b16 %v309
        %v378 = vunpack.c.l.b16 %v310
        %v379 = vunpack.c.l.b16 %v311
        %v380 = vunpack.c.l.b16 %v312
        %v381 = vunpack.c.l.b16 %v313
        %v382 = vpack.c.b16 %v351, %v350
        %v383 = vpack.c.b16 %v353, %v352
        %v384 = vpack.c.b16 %v355, %v354
        %v385 = vpack.c.b16 %v357, %v356
        %v386 = vpack.c.b16 %v359, %v358
        %v387 = vpack.c.b16 %v361, %v360
        %v388 = vpack.c.b16 %v363, %v362
        %v389 = vpack.c.b16 %v365, %v364
        %v390 = vpack.c.b16 %v367, %v366
        %v391 = vpack.c.b16 %v369, %v368
        %v392 = vpack.c.b16 %v371, %v370
        %v393 = vpack.c.b16 %v373, %v372
        %v394 = vpack.c.b16 %v375, %v374
        %v395 = vpack.c.b16 %v377, %v376
        %v396 = vpack.c.b16 %v379, %v378
        %v397 = vpack.c.b16 %v381, %v380
        %v402 = vunpack.c.l.b16 %v314
        %v403 = vunpack.c.l.b16 %v315
        %v404 = vunpack.c.l.b16 %v316
        %v405 = vunpack.c.l.b16 %v317
        %v406 = vpack.c.b16 %v403, %v402
        %v407 = vpack.c.b16 %v405, %v404
        %vm410 = vcmask 261120
        %v412 = vsel %vm410, %v382, 0
        %v415 = vsel %vm410, %v383, 0
        %v418 = vsel %vm410, %v384, 0
        %v421 = vsel %vm410, %v385, 0
        %v424 = vsel %vm410, %v386, 0
        %v427 = vsel %vm410, %v387, 0
        %v430 = vsel %vm410, %v388, 0
        %v433 = vsel %vm410, %v389, 0
        %v436 = vsel %vm410, %v390, 0
        %v439 = vsel %vm410, %v391, 0
        %v442 = vsel %vm410, %v392, 0
        %v445 = vsel %vm410, %v393, 0
        %v448 = vsel %vm410, %v394, 0
        %v451 = vsel %vm410, %v395, 0
        %v454 = vsel %vm410, %v396, 0
        %v457 = vsel %vm410, %v397, 0
        %459 = vmatprep.subr.bf16.mxu0 0
        %460 = vmatpush1.bf16.msra.mxu0 %v406
        %461 = vmatprep.subr.bf16.mxu0 0
        %462 = vmatpush1.bf16.msra.mxu0 %v407
        %463 = vmatprep.subr.bf16.mxu0 0
        %464 = vmatpush1.bf16.msra.mxu0 0
        %465 = vmatprep.subr.bf16.mxu0 0
        %466 = vmatpush1.bf16.msra.mxu0 0
        %467 = vmatprep.subr.bf16.mxu0 0
        %468 = vmatpush1.bf16.msra.mxu0 0
        %469 = vmatprep.subr.bf16.mxu0 0
        %470 = vmatpush1.bf16.msra.mxu0 0
        %471 = vmatprep.subr.bf16.mxu0 0
        %472 = vmatpush1.bf16.msra.mxu0 0
        %473 = vmatprep.subr.bf16.mxu0 0
        %474 = vmatpush1.bf16.msra.mxu0 0
        %475 = vmatprep.subr.bf16.mxu0 0
        %476 = vmatpush1.bf16.msra.mxu0 0
        %477 = vmatprep.subr.bf16.mxu0 0
        %478 = vmatpush1.bf16.msra.mxu0 0
        %479 = vmatprep.subr.bf16.mxu0 0
        %480 = vmatpush1.bf16.msra.mxu0 0
        %481 = vmatprep.subr.bf16.mxu0 0
        %482 = vmatpush1.bf16.msra.mxu0 0
        %483 = vmatprep.subr.bf16.mxu0 0
        %484 = vmatpush1.bf16.msra.mxu0 0
        %485 = vmatprep.subr.bf16.mxu0 0
        %486 = vmatpush1.bf16.msra.mxu0 0
        %487 = vmatprep.subr.bf16.mxu0 0
        %488 = vmatpush1.bf16.msra.mxu0 0
        %489 = vmatprep.subr.bf16.mxu0 0
        %490 = vmatpush1.bf16.msra.mxu0 0
        %491 = vmatprep.mubr.bf16.mxu0 0
        %492 = vmatmul.mubr.bf16.gmra.mrb[0].mxu0 %v412
        %v493 = vpop.f32.mrb[0].mxu0
        %v494 = vadd.f32 0.0, %v493
        %v495 = vpop.f32.mrb[0].mxu0
        %v496 = vpop.f32.mrb[0].mxu0
        %v497 = vadd.f32 0.0, %v496
        %v498 = vpop.f32.mrb[0].mxu0
        %499 = vmatprep.mubr.bf16.mxu0 0
        %500 = vmatmul.mubr.bf16.gmra.mrb[0].mxu0 %v415
        %v501 = vpop.f32.mrb[0].mxu0
        %v502 = vadd.f32 0.0, %v501
        %v503 = vpop.f32.mrb[0].mxu0
        %v504 = vpop.f32.mrb[0].mxu0
        %v505 = vadd.f32 0.0, %v504
        %v506 = vpop.f32.mrb[0].mxu0
        %507 = vmatprep.mubr.bf16.mxu0 0
        %508 = vmatmul.mubr.bf16.gmra.mrb[0].mxu0 %v418
        %v509 = vpop.f32.mrb[0].mxu0
        %v510 = vadd.f32 0.0, %v509
        %v511 = vpop.f32.mrb[0].mxu0
        %v512 = vpop.f32.mrb[0].mxu0
        %v513 = vadd.f32 0.0, %v512
        %v514 = vpop.f32.mrb[0].mxu0
        %515 = vmatprep.mubr.bf16.mxu0 0
        %516 = vmatmul.mubr.bf16.gmra.mrb[0].mxu0 %v421
        %v517 = vpop.f32.mrb[0].mxu0
        %v518 = vadd.f32 0.0, %v517
        %v519 = vpop.f32.mrb[0].mxu0
        %v520 = vpop.f32.mrb[0].mxu0
        %v521 = vadd.f32 0.0, %v520
        %v522 = vpop.f32.mrb[0].mxu0
        %523 = vmatprep.mubr.bf16.mxu0 0
        %524 = vmatmul.mubr.bf16.gmra.mrb[0].mxu0 %v424
        %v525 = vpop.f32.mrb[0].mxu0
        %v526 = vadd.f32 0.0, %v525
        %v527 = vpop.f32.mrb[0].mxu0
        %v528 = vpop.f32.mrb[0].mxu0
        %v529 = vadd.f32 0.0, %v528
        %v530 = vpop.f32.mrb[0].mxu0
        %531 = vmatprep.mubr.bf16.mxu0 0
        %532 = vmatmul.mubr.bf16.gmra.mrb[0].mxu0 %v427
        %v533 = vpop.f32.mrb[0].mxu0
        %v534 = vadd.f32 0.0, %v533
        %v535 = vpop.f32.mrb[0].mxu0
        %v536 = vpop.f32.mrb[0].mxu0
        %v537 = vadd.f32 0.0, %v536
        %v538 = vpop.f32.mrb[0].mxu0
        %539 = vmatprep.mubr.bf16.mxu0 0
        %540 = vmatmul.mubr.bf16.gmra.mrb[0].mxu0 %v430
        %v541 = vpop.f32.mrb[0].mxu0
        %v542 = vadd.f32 0.0, %v541
        %v543 = vpop.f32.mrb[0].mxu0
        %v544 = vpop.f32.mrb[0].mxu0
        %v545 = vadd.f32 0.0, %v544
        %v546 = vpop.f32.mrb[0].mxu0
        %547 = vmatprep.mubr.bf16.mxu0 0
        %548 = vmatmul.mubr.bf16.gmra.mrb[0].mxu0 %v433
        %v549 = vpop.f32.mrb[0].mxu0
        %v550 = vadd.f32 0.0, %v549
        %v551 = vpop.f32.mrb[0].mxu0
        %v552 = vpop.f32.mrb[0].mxu0
        %v553 = vadd.f32 0.0, %v552
        %v554 = vpop.f32.mrb[0].mxu0
        %555 = vmatprep.mubr.bf16.mxu0 0
        %556 = vmatmul.mubr.bf16.gmra.mrb[0].mxu0 %v436
        %v557 = vpop.f32.mrb[0].mxu0
        %v558 = vadd.f32 0.0, %v557
        %v559 = vpop.f32.mrb[0].mxu0
        %v560 = vpop.f32.mrb[0].mxu0
        %v561 = vadd.f32 0.0, %v560
        %v562 = vpop.f32.mrb[0].mxu0
        %563 = vmatprep.mubr.bf16.mxu0 0
        %564 = vmatmul.mubr.bf16.gmra.mrb[0].mxu0 %v439
        %v565 = vpop.f32.mrb[0].mxu0
        %v566 = vadd.f32 0.0, %v565
        %v567 = vpop.f32.mrb[0].mxu0
        %v568 = vpop.f32.mrb[0].mxu0
        %v569 = vadd.f32 0.0, %v568
        %v570 = vpop.f32.mrb[0].mxu0
        %571 = vmatprep.mubr.bf16.mxu0 0
        %572 = vmatmul.mubr.bf16.gmra.mrb[0].mxu0 %v442
        %v573 = vpop.f32.mrb[0].mxu0
        %v574 = vadd.f32 0.0, %v573
        %v575 = vpop.f32.mrb[0].mxu0
        %v576 = vpop.f32.mrb[0].mxu0
        %v577 = vadd.f32 0.0, %v576
        %v578 = vpop.f32.mrb[0].mxu0
        %579 = vmatprep.mubr.bf16.mxu0 0
        %580 = vmatmul.mubr.bf16.gmra.mrb[0].mxu0 %v445
        %v581 = vpop.f32.mrb[0].mxu0
        %v582 = vadd.f32 0.0, %v581
        %v583 = vpop.f32.mrb[0].mxu0
        %v584 = vpop.f32.mrb[0].mxu0
        %v585 = vadd.f32 0.0, %v584
        %v586 = vpop.f32.mrb[0].mxu0
        %587 = vmatprep.mubr.bf16.mxu0 0
        %588 = vmatmul.mubr.bf16.gmra.mrb[0].mxu0 %v448
        %v589 = vpop.f32.mrb[0].mxu0
        %v590 = vadd.f32 0.0, %v589
        %v591 = vpop.f32.mrb[0].mxu0
        %v592 = vpop.f32.mrb[0].mxu0
        %v593 = vadd.f32 0.0, %v592
        %v594 = vpop.f32.mrb[0].mxu0
        %595 = vmatprep.mubr.bf16.mxu0 0
        %596 = vmatmul.mubr.bf16.gmra.mrb[0].mxu0 %v451
        %v597 = vpop.f32.mrb[0].mxu0
        %v598 = vadd.f32 0.0, %v597
        %v599 = vpop.f32.mrb[0].mxu0
        %v600 = vpop.f32.mrb[0].mxu0
        %v601 = vadd.f32 0.0, %v600
        %v602 = vpop.f32.mrb[0].mxu0
        %603 = vmatprep.mubr.bf16.mxu0 0
        %604 = vmatmul.mubr.bf16.gmra.mrb[0].mxu0 %v454
        %v605 = vpop.f32.mrb[0].mxu0
        %v606 = vadd.f32 0.0, %v605
        %v607 = vpop.f32.mrb[0].mxu0
        %v608 = vpop.f32.mrb[0].mxu0
        %v609 = vadd.f32 0.0, %v608
        %v610 = vpop.f32.mrb[0].mxu0
        %611 = vmatprep.mubr.bf16.mxu0 0
        %612 = vmatmul.mubr.bf16.gmra.mrb[0].mxu0 %v457
        %v613 = vpop.f32.mrb[0].mxu0
        %v614 = vadd.f32 0.0, %v613
        %v615 = vpop.f32.mrb[0].mxu0
        %v616 = vpop.f32.mrb[0].mxu0
        %v617 = vadd.f32 0.0, %v616
        %v618 = vpop.f32.mrb[0].mxu0
        %619 = vdwg.mxu0
        %v620 = vld [vmem:[#allocation2] sm:$0xff]
        %v621 = vld [vmem:[#allocation2 + $0x8] sm:$0xff]
        %v622 = vld [vmem:[#allocation2 + $0x10] sm:$0xff]
        %v623 = vld [vmem:[#allocation2 + $0x18] sm:$0xff]
        %v624 = vld [vmem:[#allocation2 + $0x20] sm:$0xff]
        %v625 = vld [vmem:[#allocation2 + $0x28] sm:$0xff]
        %v626 = vld [vmem:[#allocation2 + $0x30] sm:$0xff]
        %v627 = vld [vmem:[#allocation2 + $0x38] sm:$0xff]
        %v628 = vld [vmem:[#allocation2 + $0x40] sm:$0xff]
        %v629 = vld [vmem:[#allocation2 + $0x48] sm:$0xff]
        %v630 = vld [vmem:[#allocation2 + $0x50] sm:$0xff]
        %v631 = vld [vmem:[#allocation2 + $0x58] sm:$0xff]
        %v632 = vld [vmem:[#allocation2 + $0x60] sm:$0xff]
        %v633 = vld [vmem:[#allocation2 + $0x68] sm:$0xff]
        %v634 = vld [vmem:[#allocation2 + $0x70] sm:$0xff]
        %v635 = vld [vmem:[#allocation2 + $0x78] sm:$0xff]
        %v636 = vld [vmem:[%s216] sm:$0xff]
        %v637 = vld [vmem:[%s216 + $0x8] sm:$0xff]
        %v638 = vld [vmem:[%s216 + $0x10] sm:$0xff]
        %v639 = vld [vmem:[%s216 + $0x18] sm:$0xff]
        %v640 = vld [vmem:[%s216 + $0x20] sm:$0xff]
        %v641 = vld [vmem:[%s216 + $0x28] sm:$0xff]
        %v642 = vld [vmem:[%s216 + $0x30] sm:$0xff]
        %v643 = vld [vmem:[%s216 + $0x38] sm:$0xff]
        %v644 = vld [vmem:[%s216 + $0x40] sm:$0xff]
        %v645 = vld [vmem:[%s216 + $0x48] sm:$0xff]
        %v646 = vld [vmem:[%s216 + $0x50] sm:$0xff]
        %v647 = vld [vmem:[%s216 + $0x58] sm:$0xff]
        %v648 = vld [vmem:[%s216 + $0x60] sm:$0xff]
        %v649 = vld [vmem:[%s216 + $0x68] sm:$0xff]
        %v650 = vld [vmem:[%s216 + $0x70] sm:$0xff]
        %v651 = vld [vmem:[%s216 + $0x78] sm:$0xff]
        %v652 = vpack.c.bf16 %v497, %v494
        %v653 = vpack.c.bf16 %v505, %v502
        %v654 = vpack.c.bf16 %v513, %v510
        %v655 = vpack.c.bf16 %v521, %v518
        %v656 = vpack.c.bf16 %v529, %v526
        %v657 = vpack.c.bf16 %v537, %v534
        %v658 = vpack.c.bf16 %v545, %v542
        %v659 = vpack.c.bf16 %v553, %v550
        %v660 = vpack.c.bf16 %v561, %v558
        %v661 = vpack.c.bf16 %v569, %v566
        %v662 = vpack.c.bf16 %v577, %v574
        %v663 = vpack.c.bf16 %v585, %v582
        %v664 = vpack.c.bf16 %v593, %v590
        %v665 = vpack.c.bf16 %v601, %v598
        %v666 = vpack.c.bf16 %v609, %v606
        %v667 = vpack.c.bf16 %v617, %v614
        %v684 = vunpack.c.l.b16 %v636
        %v685 = vunpack.c.h.b16 %v636
        %v686 = vunpack.c.l.b16 %v637
        %v687 = vunpack.c.h.b16 %v637
        %v688 = vunpack.c.l.b16 %v638
        %v689 = vunpack.c.h.b16 %v638
        %v690 = vunpack.c.l.b16 %v639
        %v691 = vunpack.c.h.b16 %v639
        %v692 = vunpack.c.l.b16 %v640
        %v693 = vunpack.c.h.b16 %v640
        %v694 = vunpack.c.l.b16 %v641
        %v695 = vunpack.c.h.b16 %v641
        %v696 = vunpack.c.l.b16 %v642
        %v697 = vunpack.c.h.b16 %v642
        %v698 = vunpack.c.l.b16 %v643
        %v699 = vunpack.c.h.b16 %v643
        %v700 = vunpack.c.l.b16 %v644
        %v701 = vunpack.c.h.b16 %v644
        %v702 = vunpack.c.l.b16 %v645
        %v703 = vunpack.c.h.b16 %v645
        %v704 = vunpack.c.l.b16 %v646
        %v705 = vunpack.c.h.b16 %v646
        %v706 = vunpack.c.l.b16 %v647
        %v707 = vunpack.c.h.b16 %v647
        %v708 = vunpack.c.l.b16 %v648
        %v709 = vunpack.c.h.b16 %v648
        %v710 = vunpack.c.l.b16 %v649
        %v711 = vunpack.c.h.b16 %v649
        %v712 = vunpack.c.l.b16 %v650
        %v713 = vunpack.c.h.b16 %v650
        %v714 = vunpack.c.l.b16 %v651
        %v715 = vunpack.c.h.b16 %v651
        %v716 = vpack.c.b16 %v686, %v684
        %v717 = vpack.c.b16 %v687, %v685
        %v718 = vpack.c.b16 %v690, %v688
        %v719 = vpack.c.b16 %v691, %v689
        %v720 = vpack.c.b16 %v694, %v692
        %v721 = vpack.c.b16 %v695, %v693
        %v722 = vpack.c.b16 %v698, %v696
        %v723 = vpack.c.b16 %v699, %v697
        %v724 = vpack.c.b16 %v702, %v700
        %v725 = vpack.c.b16 %v703, %v701
        %v726 = vpack.c.b16 %v706, %v704
        %v727 = vpack.c.b16 %v707, %v705
        %v728 = vpack.c.b16 %v710, %v708
        %v729 = vpack.c.b16 %v711, %v709
        %v730 = vpack.c.b16 %v714, %v712
        %v731 = vpack.c.b16 %v715, %v713
        %748 = vmatprep.subr.bf16.mxu0 0
        %749 = vmatpush1.bf16.msra.mxu0 %v652
        %750 = vmatprep.subr.bf16.mxu0 0
        %751 = vmatpush1.bf16.msra.mxu0 %v653
        %752 = vmatprep.subr.bf16.mxu0 0
        %753 = vmatpush1.bf16.msra.mxu0 %v654
        %754 = vmatprep.subr.bf16.mxu0 0
        %755 = vmatpush1.bf16.msra.mxu0 %v655
        %756 = vmatprep.subr.bf16.mxu0 0
        %757 = vmatpush1.bf16.msra.mxu0 %v656
        %758 = vmatprep.subr.bf16.mxu0 0
        %759 = vmatpush1.bf16.msra.mxu0 %v657
        %760 = vmatprep.subr.bf16.mxu0 0
        %761 = vmatpush1.bf16.msra.mxu0 %v658
        %762 = vmatprep.subr.bf16.mxu0 0
        %763 = vmatpush1.bf16.msra.mxu0 %v659
        %764 = vmatprep.subr.bf16.mxu0 0
        %765 = vmatpush1.bf16.msra.mxu0 %v660
        %766 = vmatprep.subr.bf16.mxu0 0
        %767 = vmatpush1.bf16.msra.mxu0 %v661
        %768 = vmatprep.subr.bf16.mxu0 0
        %769 = vmatpush1.bf16.msra.mxu0 %v662
        %770 = vmatprep.subr.bf16.mxu0 0
        %771 = vmatpush1.bf16.msra.mxu0 %v663
        %772 = vmatprep.subr.bf16.mxu0 0
        %773 = vmatpush1.bf16.msra.mxu0 %v664
        %774 = vmatprep.subr.bf16.mxu0 0
        %775 = vmatpush1.bf16.msra.mxu0 %v665
        %776 = vmatprep.subr.bf16.mxu0 0
        %777 = vmatpush1.bf16.msra.mxu0 %v666
        %778 = vmatprep.subr.bf16.mxu0 0
        %779 = vmatpush1.bf16.msra.mxu0 %v667
        %780 = vmatprep.mubr.bf16.mxu0 %v717
        %781 = vmatmul.mubr.bf16.gmra.mrb[0].mxu0 %v716
        %v782 = vpop.f32.mrb[0].mxu0
        %v783 = vadd.f32 0.0, %v782
        %v784 = vpop.f32.mrb[0].mxu0
        %v785 = vpop.f32.mrb[0].mxu0
        %v786 = vadd.f32 0.0, %v785
        %v787 = vpop.f32.mrb[0].mxu0
        %788 = vmatprep.mubr.bf16.mxu0 %v719
        %789 = vmatmul.mubr.bf16.gmra.mrb[0].mxu0 %v718
        %v790 = vpop.f32.mrb[0].mxu0
        %v791 = vadd.f32 0.0, %v790
        %v792 = vpop.f32.mrb[0].mxu0
        %v793 = vpop.f32.mrb[0].mxu0
        %v794 = vadd.f32 0.0, %v793
        %v795 = vpop.f32.mrb[0].mxu0
        %796 = vmatprep.mubr.bf16.mxu0 %v721
        %797 = vmatmul.mubr.bf16.gmra.mrb[0].mxu0 %v720
        %v798 = vpop.f32.mrb[0].mxu0
        %v799 = vadd.f32 0.0, %v798
        %v800 = vpop.f32.mrb[0].mxu0
        %v801 = vpop.f32.mrb[0].mxu0
        %v802 = vadd.f32 0.0, %v801
        %v803 = vpop.f32.mrb[0].mxu0
        %804 = vmatprep.mubr.bf16.mxu0 %v723
        %805 = vmatmul.mubr.bf16.gmra.mrb[0].mxu0 %v722
        %v806 = vpop.f32.mrb[0].mxu0
        %v807 = vadd.f32 0.0, %v806
        %v808 = vpop.f32.mrb[0].mxu0
        %v809 = vpop.f32.mrb[0].mxu0
        %v810 = vadd.f32 0.0, %v809
        %v811 = vpop.f32.mrb[0].mxu0
        %812 = vmatprep.mubr.bf16.mxu0 %v725
        %813 = vmatmul.mubr.bf16.gmra.mrb[0].mxu0 %v724
        %v814 = vpop.f32.mrb[0].mxu0
        %v815 = vadd.f32 0.0, %v814
        %v816 = vpop.f32.mrb[0].mxu0
        %v817 = vpop.f32.mrb[0].mxu0
        %v818 = vadd.f32 0.0, %v817
        %v819 = vpop.f32.mrb[0].mxu0
        %820 = vmatprep.mubr.bf16.mxu0 %v727
        %821 = vmatmul.mubr.bf16.gmra.mrb[0].mxu0 %v726
        %v822 = vpop.f32.mrb[0].mxu0
        %v823 = vadd.f32 0.0, %v822
        %v824 = vpop.f32.mrb[0].mxu0
        %v825 = vpop.f32.mrb[0].mxu0
        %v826 = vadd.f32 0.0, %v825
        %v827 = vpop.f32.mrb[0].mxu0
        %828 = vmatprep.mubr.bf16.mxu0 %v729
        %829 = vmatmul.mubr.bf16.gmra.mrb[0].mxu0 %v728
        %v830 = vpop.f32.mrb[0].mxu0
        %v831 = vadd.f32 0.0, %v830
        %v832 = vpop.f32.mrb[0].mxu0
        %v833 = vpop.f32.mrb[0].mxu0
        %v834 = vadd.f32 0.0, %v833
        %v835 = vpop.f32.mrb[0].mxu0
        %836 = vmatprep.mubr.bf16.mxu0 %v731
        %837 = vmatmul.mubr.bf16.gmra.mrb[0].mxu0 %v730
        %v838 = vpop.f32.mrb[0].mxu0
        %v839 = vadd.f32 0.0, %v838
        %v840 = vpop.f32.mrb[0].mxu0
        %v841 = vpop.f32.mrb[0].mxu0
        %v842 = vadd.f32 0.0, %v841
        %v843 = vpop.f32.mrb[0].mxu0
        %844 = vdwg.mxu0
        %v845 = vadd.f32 %v620, %v783
        %v846 = vadd.f32 %v621, %v786
        %v847 = vadd.f32 %v622, %v791
        %v848 = vadd.f32 %v623, %v794
        %v849 = vadd.f32 %v624, %v799
        %v850 = vadd.f32 %v625, %v802
        %v851 = vadd.f32 %v626, %v807
        %v852 = vadd.f32 %v627, %v810
        %v853 = vadd.f32 %v628, %v815
        %v854 = vadd.f32 %v629, %v818
        %v855 = vadd.f32 %v630, %v823
        %v856 = vadd.f32 %v631, %v826
        %v857 = vadd.f32 %v632, %v831
        %v858 = vadd.f32 %v633, %v834
        %v859 = vadd.f32 %v634, %v839
        %v860 = vadd.f32 %v635, %v842
        %vm861 = vcmask 64512
        %862 = vst.msk [vmem:[#allocation2] sm:$0xff] %vm861, %v845
        %863 = vst.msk [vmem:[#allocation2 + $0x8] sm:$0xff] %vm861, %v846
        %864 = vst.msk [vmem:[#allocation2 + $0x10] sm:$0xff] %vm861, %v847
        %865 = vst.msk [vmem:[#allocation2 + $0x18] sm:$0xff] %vm861, %v848
        %866 = vst.msk [vmem:[#allocation2 + $0x20] sm:$0xff] %vm861, %v849
        %867 = vst.msk [vmem:[#allocation2 + $0x28] sm:$0xff] %vm861, %v850
        %868 = vst.msk [vmem:[#allocation2 + $0x30] sm:$0xff] %vm861, %v851
        %869 = vst.msk [vmem:[#allocation2 + $0x38] sm:$0xff] %vm861, %v852
        %870 = vst.msk [vmem:[#allocation2 + $0x40] sm:$0xff] %vm861, %v853
        %871 = vst.msk [vmem:[#allocation2 + $0x48] sm:$0xff] %vm861, %v854
        %872 = vst.msk [vmem:[#allocation2 + $0x50] sm:$0xff] %vm861, %v855
        %873 = vst.msk [vmem:[#allocation2 + $0x58] sm:$0xff] %vm861, %v856
        %874 = vst.msk [vmem:[#allocation2 + $0x60] sm:$0xff] %vm861, %v857
        %875 = vst.msk [vmem:[#allocation2 + $0x68] sm:$0xff] %vm861, %v858
        %876 = vst.msk [vmem:[#allocation2 + $0x70] sm:$0xff] %vm861, %v859
        %877 = vst.msk [vmem:[#allocation2 + $0x78] sm:$0xff] %vm861, %v860
        %p878 = scmp.eq.s32.totalorder %s23, 1
        // Predicated region
        $region45: #{tpu_custom_call.1} parent=35 // pred_check
          %p879 = pneg %p878
        $region46: #{tpu_custom_call.1} parent=35 // pred_check_branch
          %881 = sbr.rel (%p879) target = $region48
        $region47: #{tpu_custom_call.1} parent=35 // pred_region
          %v882 = vld [vmem:[#allocation2] sm:$0xff]
          %v883 = vld [vmem:[#allocation2 + $0x8] sm:$0xff]
          %v884 = vld [vmem:[#allocation2 + $0x10] sm:$0xff]
          %v885 = vld [vmem:[#allocation2 + $0x18] sm:$0xff]
          %v886 = vld [vmem:[#allocation2 + $0x20] sm:$0xff]
          %v887 = vld [vmem:[#allocation2 + $0x28] sm:$0xff]
          %v888 = vld [vmem:[#allocation2 + $0x30] sm:$0xff]
          %v889 = vld [vmem:[#allocation2 + $0x38] sm:$0xff]
          %v890 = vld [vmem:[#allocation2 + $0x40] sm:$0xff]
          %v891 = vld [vmem:[#allocation2 + $0x48] sm:$0xff]
          %v892 = vld [vmem:[#allocation2 + $0x50] sm:$0xff]
          %v893 = vld [vmem:[#allocation2 + $0x58] sm:$0xff]
          %v894 = vld [vmem:[#allocation2 + $0x60] sm:$0xff]
          %v895 = vld [vmem:[#allocation2 + $0x68] sm:$0xff]
          %v896 = vld [vmem:[#allocation2 + $0x70] sm:$0xff]
          %v897 = vld [vmem:[#allocation2 + $0x78] sm:$0xff]
          %v898 = vld [vmem:[%s3] sm:$0x1]
          %v900 = vlaneseq
          %v901 = vshrl.u32 %v900, 7
          %v902 = vsub.s32 0, %v901
          %v903 = vrot.slane %v898, %v902
          %v905 = vadd.f32 %v882, %v903
          %v906 = vadd.f32 %v883, %v903
          %v907 = vadd.f32 %v884, %v903
          %v908 = vadd.f32 %v885, %v903
          %v909 = vadd.f32 %v886, %v903
          %v910 = vadd.f32 %v887, %v903
          %v911 = vadd.f32 %v888, %v903
          %v912 = vadd.f32 %v889, %v903
          %v913 = vadd.f32 %v890, %v903
          %v914 = vadd.f32 %v891, %v903
          %v915 = vadd.f32 %v892, %v903
          %v916 = vadd.f32 %v893, %v903
          %v917 = vadd.f32 %v894, %v903
          %v918 = vadd.f32 %v895, %v903
          %v919 = vadd.f32 %v896, %v903
          %v920 = vadd.f32 %v897, %v903
          %v921 = vsel %vm861, %v905, -inf
          %922 = vmax.xlane.f32.xlu0 %v921
          %v923 = vpop.xlane.xlu0 %922
          %v924 = vsel %vm861, %v906, -inf
          %925 = vmax.xlane.f32.xlu0 %v924
          %v926 = vpop.xlane.xlu0 %925
          %v927 = vsel %vm861, %v907, -inf
          %928 = vmax.xlane.f32.xlu0 %v927
          %v929 = vpop.xlane.xlu0 %928
          %v930 = vsel %vm861, %v908, -inf
          %931 = vmax.xlane.f32.xlu0 %v930
          %v932 = vpop.xlane.xlu0 %931
          %v933 = vsel %vm861, %v909, -inf
          %934 = vmax.xlane.f32.xlu0 %v933
          %v935 = vpop.xlane.xlu0 %934
          %v936 = vsel %vm861, %v910, -inf
          %937 = vmax.xlane.f32.xlu0 %v936
          %v938 = vpop.xlane.xlu0 %937
          %v939 = vsel %vm861, %v911, -inf
          %940 = vmax.xlane.f32.xlu0 %v939
          %v941 = vpop.xlane.xlu0 %940
          %v942 = vsel %vm861, %v912, -inf
          %943 = vmax.xlane.f32.xlu0 %v942
          %v944 = vpop.xlane.xlu0 %943
          %v945 = vsel %vm861, %v913, -inf
          %946 = vmax.xlane.f32.xlu0 %v945
          %v947 = vpop.xlane.xlu0 %946
          %v948 = vsel %vm861, %v914, -inf
          %949 = vmax.xlane.f32.xlu0 %v948
          %v950 = vpop.xlane.xlu0 %949
          %v951 = vsel %vm861, %v915, -inf
          %952 = vmax.xlane.f32.xlu0 %v951
          %v953 = vpop.xlane.xlu0 %952
          %v954 = vsel %vm861, %v916, -inf
          %955 = vmax.xlane.f32.xlu0 %v954
          %v956 = vpop.xlane.xlu0 %955
          %v957 = vsel %vm861, %v917, -inf
          %958 = vmax.xlane.f32.xlu0 %v957
          %v959 = vpop.xlane.xlu0 %958
          %v960 = vsel %vm861, %v918, -inf
          %961 = vmax.xlane.f32.xlu0 %v960
          %v962 = vpop.xlane.xlu0 %961
          %v963 = vsel %vm861, %v919, -inf
          %964 = vmax.xlane.f32.xlu0 %v963
          %v965 = vpop.xlane.xlu0 %964
          %v966 = vsel %vm861, %v920, -inf
          %967 = vmax.xlane.f32.xlu0 %v966
          %v968 = vpop.xlane.xlu0 %967
          %v969 = vsub.f32 %v905, %v923
          %v970 = vsub.f32 %v906, %v926
          %v971 = vsub.f32 %v907, %v929
          %v972 = vsub.f32 %v908, %v932
          %v973 = vsub.f32 %v909, %v935
          %v974 = vsub.f32 %v910, %v938
          %v975 = vsub.f32 %v911, %v941
          %v976 = vsub.f32 %v912, %v944
          %v977 = vsub.f32 %v913, %v947
          %v978 = vsub.f32 %v914, %v950
          %v979 = vsub.f32 %v915, %v953
          %v980 = vsub.f32 %v916, %v956
          %v981 = vsub.f32 %v917, %v959
          %v982 = vsub.f32 %v918, %v962
          %v983 = vsub.f32 %v919, %v965
          %v984 = vsub.f32 %v920, %v968
          %v985 = vmul.f32 %v969, 1.442695
          %v986 = vpow.pop %v985
          %v987 = vmul.f32 %v970, 1.442695
          %v988 = vpow.pop %v987
          %v989 = vmul.f32 %v971, 1.442695
          %v990 = vpow.pop %v989
          %v991 = vmul.f32 %v972, 1.442695
          %v992 = vpow.pop %v991
          %v993 = vmul.f32 %v973, 1.442695
          %v994 = vpow.pop %v993
          %v995 = vmul.f32 %v974, 1.442695
          %v996 = vpow.pop %v995
          %v997 = vmul.f32 %v975, 1.442695
          %v998 = vpow.pop %v997
          %v999 = vmul.f32 %v976, 1.442695
          %v1000 = vpow.pop %v999
          %v1001 = vmul.f32 %v977, 1.442695
          %v1002 = vpow.pop %v1001
          %v1003 = vmul.f32 %v978, 1.442695
          %v1004 = vpow.pop %v1003
          %v1005 = vmul.f32 %v979, 1.442695
          %v1006 = vpow.pop %v1005
          %v1007 = vmul.f32 %v980, 1.442695
          %v1008 = vpow.pop %v1007
          %v1009 = vmul.f32 %v981, 1.442695
          %v1010 = vpow.pop %v1009
          %v1011 = vmul.f32 %v982, 1.442695
          %v1012 = vpow.pop %v1011
          %v1013 = vmul.f32 %v983, 1.442695
          %v1014 = vpow.pop %v1013
          %v1015 = vmul.f32 %v984, 1.442695
          %v1016 = vpow.pop %v1015
          %v1017 = vsel %vm861, %v986, 0.0
          %1018 = vadd.xlane.f32.xlu0 %v1017
          %v1019 = vpop.xlane.xlu0 %1018
          %v1020 = vsel %vm861, %v988, 0.0
          %1021 = vadd.xlane.f32.xlu0 %v1020
          %v1022 = vpop.xlane.xlu0 %1021
          %v1023 = vsel %vm861, %v990, 0.0
          %1024 = vadd.xlane.f32.xlu0 %v1023
          %v1025 = vpop.xlane.xlu0 %1024
          %v1026 = vsel %vm861, %v992, 0.0
          %1027 = vadd.xlane.f32.xlu0 %v1026
          %v1028 = vpop.xlane.xlu0 %1027
          %v1029 = vsel %vm861, %v994, 0.0
          %1030 = vadd.xlane.f32.xlu0 %v1029
          %v1031 = vpop.xlane.xlu0 %1030
          %v1032 = vsel %vm861, %v996, 0.0
          %1033 = vadd.xlane.f32.xlu0 %v1032
          %v1034 = vpop.xlane.xlu0 %1033
          %v1035 = vsel %vm861, %v998, 0.0
          %1036 = vadd.xlane.f32.xlu0 %v1035
          %v1037 = vpop.xlane.xlu0 %1036
          %v1038 = vsel %vm861, %v1000, 0.0
          %1039 = vadd.xlane.f32.xlu0 %v1038
          %v1040 = vpop.xlane.xlu0 %1039
          %v1041 = vsel %vm861, %v1002, 0.0
          %1042 = vadd.xlane.f32.xlu0 %v1041
          %v1043 = vpop.xlane.xlu0 %1042
          %v1044 = vsel %vm861, %v1004, 0.0
          %1045 = vadd.xlane.f32.xlu0 %v1044
          %v1046 = vpop.xlane.xlu0 %1045
          %v1047 = vsel %vm861, %v1006, 0.0
          %1048 = vadd.xlane.f32.xlu0 %v1047
          %v1049 = vpop.xlane.xlu0 %1048
          %v1050 = vsel %vm861, %v1008, 0.0
          %1051 = vadd.xlane.f32.xlu0 %v1050
          %v1052 = vpop.xlane.xlu0 %1051
          %v1053 = vsel %vm861, %v1010, 0.0
          %1054 = vadd.xlane.f32.xlu0 %v1053
          %v1055 = vpop.xlane.xlu0 %1054
          %v1056 = vsel %vm861, %v1012, 0.0
          %1057 = vadd.xlane.f32.xlu0 %v1056
          %v1058 = vpop.xlane.xlu0 %1057
          %v1059 = vsel %vm861, %v1014, 0.0
          %1060 = vadd.xlane.f32.xlu0 %v1059
          %v1061 = vpop.xlane.xlu0 %1060
          %v1062 = vsel %vm861, %v1016, 0.0
          %1063 = vadd.xlane.f32.xlu0 %v1062
          %v1064 = vpop.xlane.xlu0 %1063
          %v1065 = vlog2.pop %v1019
          %v1066 = vmul.f32 %v1065, 0.6931472
          %v1067 = vlog2.pop %v1022
          %v1068 = vmul.f32 %v1067, 0.6931472
          %v1069 = vlog2.pop %v1025
          %v1070 = vmul.f32 %v1069, 0.6931472
          %v1071 = vlog2.pop %v1028
          %v1072 = vmul.f32 %v1071, 0.6931472
          %v1073 = vlog2.pop %v1031
          %v1074 = vmul.f32 %v1073, 0.6931472
          %v1075 = vlog2.pop %v1034
          %v1076 = vmul.f32 %v1075, 0.6931472
          %v1077 = vlog2.pop %v1037
          %v1078 = vmul.f32 %v1077, 0.6931472
          %v1079 = vlog2.pop %v1040
          %v1080 = vmul.f32 %v1079, 0.6931472
          %v1081 = vlog2.pop %v1043
          %v1082 = vmul.f32 %v1081, 0.6931472
          %v1083 = vlog2.pop %v1046
          %v1084 = vmul.f32 %v1083, 0.6931472
          %v1085 = vlog2.pop %v1049
          %v1086 = vmul.f32 %v1085, 0.6931472
          %v1087 = vlog2.pop %v1052
          %v1088 = vmul.f32 %v1087, 0.6931472
          %v1089 = vlog2.pop %v1055
          %v1090 = vmul.f32 %v1089, 0.6931472
          %v1091 = vlog2.pop %v1058
          %v1092 = vmul.f32 %v1091, 0.6931472
          %v1093 = vlog2.pop %v1061
          %v1094 = vmul.f32 %v1093, 0.6931472
          %v1095 = vlog2.pop %v1064
          %v1096 = vmul.f32 %v1095, 0.6931472
          %v1097 = vsub.f32 %v969, %v1066
          %v1098 = vsub.f32 %v970, %v1068
          %v1099 = vsub.f32 %v971, %v1070
          %v1100 = vsub.f32 %v972, %v1072
          %v1101 = vsub.f32 %v973, %v1074
          %v1102 = vsub.f32 %v974, %v1076
          %v1103 = vsub.f32 %v975, %v1078
          %v1104 = vsub.f32 %v976, %v1080
          %v1105 = vsub.f32 %v977, %v1082
          %v1106 = vsub.f32 %v978, %v1084
          %v1107 = vsub.f32 %v979, %v1086
          %v1108 = vsub.f32 %v980, %v1088
          %v1109 = vsub.f32 %v981, %v1090
          %v1110 = vsub.f32 %v982, %v1092
          %v1111 = vsub.f32 %v983, %v1094
          %v1112 = vsub.f32 %v984, %v1096
          %1113 = vst.msk [vmem:[%s258] sm:$0xff] %vm861, %v1097
          %1114 = vst.msk [vmem:[%s258 + $0x8] sm:$0xff] %vm861, %v1098
          %1115 = vst.msk [vmem:[%s258 + $0x10] sm:$0xff] %vm861, %v1099
          %1116 = vst.msk [vmem:[%s258 + $0x18] sm:$0xff] %vm861, %v1100
          %1117 = vst.msk [vmem:[%s258 + $0x20] sm:$0xff] %vm861, %v1101
          %1118 = vst.msk [vmem:[%s258 + $0x28] sm:$0xff] %vm861, %v1102
          %1119 = vst.msk [vmem:[%s258 + $0x30] sm:$0xff] %vm861, %v1103
          %1120 = vst.msk [vmem:[%s258 + $0x38] sm:$0xff] %vm861, %v1104
          %1121 = vst.msk [vmem:[%s258 + $0x40] sm:$0xff] %vm861, %v1105
          %1122 = vst.msk [vmem:[%s258 + $0x48] sm:$0xff] %vm861, %v1106
          %1123 = vst.msk [vmem:[%s258 + $0x50] sm:$0xff] %vm861, %v1107
          %1124 = vst.msk [vmem:[%s258 + $0x58] sm:$0xff] %vm861, %v1108
          %1125 = vst.msk [vmem:[%s258 + $0x60] sm:$0xff] %vm861, %v1109
          %1126 = vst.msk [vmem:[%s258 + $0x68] sm:$0xff] %vm861, %v1110
          %1127 = vst.msk [vmem:[%s258 + $0x70] sm:$0xff] %vm861, %v1111
          %1128 = vst.msk [vmem:[%s258 + $0x78] sm:$0xff] %vm861, %v1112
        $region48: #{tpu_custom_call.1} parent=35 // pred_fallthru
          _
        %s1129 = smul.u32 16, %s22
        %p1130 = scmp.lt.s32.totalorder %s1129, 63
        %s1131 = scalar_select %p1130, %s1129, 63
        %s1132 = smul.addr %s1131, 8
        %s1133 = scalar_lea.vmem %s4, %s1132
        // Predicated region
        $region49: #{tpu_custom_call.1} parent=35 // pred_check
          %p1134 = pneg %p144
        $region50: #{tpu_custom_call.1} parent=35 // pred_check_branch
          %1136 = sbr.rel (%p1134) target = $region52
        $region51: #{tpu_custom_call.1} parent=35 // pred_region
          %s1137 = smul.u32 16, %s22
        $region52: #{tpu_custom_call.1} parent=35 // pred_fallthru
          _
      $region36: #{tpu_custom_call.1} parent=5 // pred_fallthru
        _
      %p1138 = scmp.le.s32.totalorder 2, %s13
      // Predicated region
      $region53: #{tpu_custom_call.1} parent=5 // pred_check
        %p1139 = pneg %p1138
      $region54: #{tpu_custom_call.1} parent=5 // pred_check_branch
        %1141 = sbr.rel (%p1139) target = $region56
      $region55: #{tpu_custom_call.1} parent=5 // pred_region
        %s1142 = ssub.s32 %s13, 2
        // Predicated region
        $region57: #{tpu_custom_call.1} parent=55 // pred_check
          %p1143 = pneg %p150
        $region58: #{tpu_custom_call.1} parent=55 // pred_check_branch
          %1145 = sbr.rel (%p1143) target = $region60
        $region59: #{tpu_custom_call.1} parent=55 // pred_region
          %s1146 = smul.u32 16, %s24
          %p1147 = scmp.lt.s32.totalorder %s1146, 63
          %s1148 = scalar_select %p1147, %s1146, 63
          %s1149 = smul.addr %s1148, 8
          %s1150 = scalar_lea.vmem %s4, %s1149
        $region60: #{tpu_custom_call.1} parent=55 // pred_fallthru
          _
      $region56: #{tpu_custom_call.1} parent=5 // pred_fallthru
        _
    $region6: #{tpu_custom_call.1} parent=1 // loop_footer
      %s17 = sadd.s32 1, %s13
    $region7: #{tpu_custom_call.1} parent=1 // loop_footer_branch
      %12 = sbr.rel target = $region3
    $region8: #{tpu_custom_call.1} parent=1 // loop_exit
      _
    %1151 = vsyncpa [#allocation4], 1
    %s1152 = scalar_lea.sflag [#allocation4], 1
    %1153 = vsyncpa %s1152, 1

</llo_original>
